<compile_context>
chip_gen: v5e
topology: v5e:2x2
jax: 0.10.0
libtpu: 0.0.40
codegen_flags: <defaults>
</compile_context>

<pallas_src>
import functools

import jax
import jax.numpy as jnp
from jax import lax
from jax.experimental import pallas as pl
from jax.experimental.pallas import tpu as pltpu


# ----------------------------- in-kernel helpers -----------------------------

def _mish(x):
    # Mish with a single transcendental (EUP):
    #   tanh(softplus(x)) = ((1 + e^x)^2 - 1) / ((1 + e^x)^2 + 1)
    t = 1.0 + jnp.exp(jnp.minimum(x, 20.0))   # clamp: for x > 20 the ratio is 1.0
    t2 = t * t
    return x * ((t2 - 1.0) / (t2 + 1.0))


# ----------------------- generation-aware sizing helpers ----------------------

def _vmem_limit_bytes():
    try:
        capacity = int(pltpu.get_tpu_info().vmem_capacity_bytes)
    except Exception:
        capacity = 64 * 1024 * 1024            # conservative (v7x-sized) fallback
    # never request the full physical VMEM (v7x only has 64 MiB per TensorCore)
    return min(int(capacity * 3 // 4), 96 * 1024 * 1024)


def _largest_tile(n_pad, cap_pts):
    """Largest multiple of 128 that divides n_pad and is <= cap_pts (>= 128)."""
    n128 = n_pad // 128
    best = 128
    for d in range(1, n128 + 1):
        if n128 % d == 0 and d * 128 <= cap_pts:
            best = d * 128
    return best


def _choose_tiles(N, C, vmem_limit):
    """Point-axis padding + per-kernel point tiles, budgeted against vmem_limit."""
    if N <= 1024:
        return N, N, N                         # whole-N blocks, no padding needed
    n_pad = ((N + 127) // 128) * 128
    # h3 per-point live bytes: double-buffered bf16 feat tile + f32 pre/post
    # activations of the 512/256/128 stages + bf16 recasts of the 512/256 stages.
    per_pt_h3 = 2 * 2 * C + 4 * (512 + 256 + 128) + 2 * (512 + 256)
    cap_h3 = max(128, int(vmem_limit * 0.4) // per_pt_h3)
    tile_h3 = _largest_tile(n_pad, min(cap_h3, 1024))      # >=512 already near roofline
    # pooling only keeps the double-buffered bf16 input tile per point.
    cap_pool = max(128, int(vmem_limit * 0.4) // (2 * 2 * C))
    tile_pool = _largest_tile(n_pad, min(cap_pool, 4096))
    return n_pad, tile_h3, tile_pool


# ------------------------------- pooling kernel -------------------------------
# One fused output per cloud: lanes [0:C] = max over points, lanes [C:2C] = mean.

def _pooling_kernel(inv_n, n_valid, feat_ref, out_ref, max_sc, sum_sc):
    n = pl.program_id(1)

    @pl.when(n == 0)
    def _():
        max_sc[...] = jnp.full_like(max_sc, -jnp.inf)
        sum_sc[...] = jnp.zeros_like(sum_sc)

    x = feat_ref[0].astype(jnp.float32)                               # (TN, C)
    if n_valid is not None:          # static: padded rows exist -> mask them out
        tile_n = x.shape[0]
        row = n * tile_n + lax.broadcasted_iota(jnp.int32, x.shape, 0)
        valid = row < n_valid
        x_max = jnp.where(valid, x, -jnp.inf)
        x_sum = jnp.where(valid, x, 0.0)
    else:
        x_max = x_sum = x
    max_sc[...] = jnp.maximum(max_sc[...], jnp.max(x_max, axis=0, keepdims=True))
    sum_sc[...] = sum_sc[...] + jnp.sum(x_sum, axis=0, keepdims=True)

    @pl.when(n == pl.num_programs(1) - 1)
    def _():
        out_ref[...] = jnp.concatenate(
            [max_sc[...], sum_sc[...] * inv_n], axis=-1)[None]        # (1, 1, 2C)


def pooling(feats_bf, n_valid, tile_n, vmem_limit):
    """feats_bf: (G, N_pad, C) bf16 -> (G, 1, 2C) f32 = [max | mean] over points."""
    G, n_pad, C = feats_bf.shape
    kernel = functools.partial(_pooling_kernel, 1.0 / n_valid,
                               n_valid if n_pad != n_valid else None)
    return pl.pallas_call(
        kernel,
        out_shape=jax.ShapeDtypeStruct((G, 1, 2 * C), jnp.float32),
        grid_spec=pltpu.PrefetchScalarGridSpec(
            num_scalar_prefetch=0,
            grid=(G, n_pad // tile_n),
            in_specs=[pl.BlockSpec((1, tile_n, C), lambda g, n: (g, n, 0))],
            out_specs=pl.BlockSpec((1, 1, 2 * C), lambda g, n: (g, 0, 0)),
            scratch_shapes=[pltpu.VMEM((1, C), jnp.float32),
                            pltpu.VMEM((1, C), jnp.float32)]),
        compiler_params=pltpu.CompilerParams(
            dimension_semantics=("parallel", "arbitrary"),
            vmem_limit_bytes=vmem_limit),
    )(feats_bf)


# ------------- fused, batched self_attention_fc x3 (global features) ----------

def _attn_pair_stage(qx, qy, beta):
    """One self_attention_fc attention stage, batched over the B (x, y) pairs.

    qx, qy: (B, O) f32 query/value rows.  Row softmax (over j) drives out_x and
    column softmax (over i) drives out_y -- exactly nn.Softmax(dim=-1) applied to
    the energy matrix and its transpose.
    """
    e = qx[:, :, None] * qy[:, None, :]                               # (B, O, O)
    px = jnp.exp(e - jnp.max(e, axis=2, keepdims=True))               # per-row max
    py = jnp.exp(e - jnp.max(e, axis=1, keepdims=True))               # per-col max
    out_x = jnp.sum(px * qx[:, None, :], axis=2) / jnp.sum(px, axis=2)
    out_y = jnp.sum(py * qy[:, :, None], axis=1) / jnp.sum(py, axis=1)
    return beta * out_x + qx, beta * out_y + qy


def _attn_chain_kernel(nb, betas_ref, g_ref,
                       w1_ref, s1_ref, t1_ref,
                       w2_ref, s2_ref, t2_ref,
                       w3_ref, s3_ref, t3_ref,
                       w1g_ref, out_ref):
    # TODO(synk): the (B, O, O) softmax stage is materialized for all pairs at once;
    # for very large B it should be chunked to bound VMEM (fine for typical small B).
    g = g_ref[...]                                          # (2B, 1024) f32
    layers = ((w1_ref, s1_ref, t1_ref, 0),
              (w2_ref, s2_ref, t2_ref, 1),
              (w3_ref, s3_ref, t3_ref, 2))
    for w_ref, s_ref, t_ref, li in layers:
        q = jnp.dot(g.astype(jnp.bfloat16), w_ref[...],
                    preferred_element_type=jnp.float32)     # (2B, O)
        q = _mish(q * s_ref[...] + t_ref[...])
        gx, gy = _attn_pair_stage(q[:nb], q[nb:], betas_ref[li])
        g = jnp.concatenate([gx, gy], axis=0)               # (2B, O)
    # hoisted h3 layer-1 "global half":  glob_part = shared_feat @ W1_glob
    out_ref[...] = jnp.dot(g.astype(jnp.bfloat16), w1g_ref[...],
                           preferred_element_type=jnp.float32)        # (2B, 512)


def attention_chain(g_init, attn_params, betas, w1g_bf, vmem_limit):
    """g_init: (2B, 1024) f32; rows [:B] = source globals (x chain), rows [B:] =
    template globals (y chain).  Returns glob_part (2B, 512) f32 = shared_feat @
    W1_glob, already ordered like the stacked h3 feature tensor: rows [:B] =
    shared_feat_1 (template head), rows [B:] = shared_feat_2 (source head)."""
    G2, I = g_init.shape
    Ch = w1g_bf.shape[1]

    operands = [betas, g_init]
    in_specs = [pl.BlockSpec(memory_space=pltpu.MemorySpace.SMEM),
                pl.BlockSpec((G2, I), lambda i: (0, 0))]
    for p in attn_params:
        w_bf = p["w"].astype(jnp.bfloat16)
        operands += [w_bf, p["scale"], p["shift"]]
        in_specs += [pl.BlockSpec(w_bf.shape, lambda i: (0, 0)),
                     pl.BlockSpec(p["scale"].shape, lambda i: (0, 0)),
                     pl.BlockSpec(p["shift"].shape, lambda i: (0, 0))]
    operands.append(w1g_bf)
    in_specs.append(pl.BlockSpec(w1g_bf.shape, lambda i: (0, 0)))

    return pl.pallas_call(
        functools.partial(_attn_chain_kernel, G2 // 2),
        out_shape=jax.ShapeDtypeStruct((G2, Ch), jnp.float32),
        grid_spec=pltpu.PrefetchScalarGridSpec(
            num_scalar_prefetch=0,
            grid=(1,),
            in_specs=in_specs,
            out_specs=pl.BlockSpec((G2, Ch), lambda i: (0, 0))),
        compiler_params=pltpu.CompilerParams(
            dimension_semantics=("arbitrary",),
            vmem_limit_bytes=vmem_limit),
    )(*operands)


# ------------------------- fused h3 heads (mask decoder) ----------------------

def _h3_kernel(feat_ref, gpart_ref,
               w1f_ref, s1_ref, t1_ref,
               w2_ref, s2_ref, t2_ref,
               w3_ref, s3_ref, t3_ref,
               w4_ref, b4_ref, out_ref):
    feat = feat_ref[0]                                                # (TN, C) bf16

    # layer 1: concat([feat, glob]) @ W1 == feat @ W1_feat + glob @ W1_glob;
    # the glob half (gpart) is precomputed once per cloud in the attention kernel.
    h = jnp.dot(feat, w1f_ref[...], preferred_element_type=jnp.float32)
    h = _mish((h + gpart_ref[0]) * s1_ref[...] + t1_ref[...])          # (TN, 512)

    h = jnp.dot(h.astype(jnp.bfloat16), w2_ref[...], preferred_element_type=jnp.float32)
    h = _mish(h * s2_ref[...] + t2_ref[...])                           # (TN, 256)

    h = jnp.dot(h.astype(jnp.bfloat16), w3_ref[...], preferred_element_type=jnp.float32)
    h = _mish(h * s3_ref[...] + t3_ref[...])                           # (TN, 128)

    # final Conv1d(128, 1, 1) + bias + sigmoid, emitted lane-dense as a (1, TN) row.
    # NOTE: if profiling shows Mosaic materializing a (TN,128) relayout of `h` here,
    # switch to h @ w4.T -> (TN,1) plus a small (TN,1)->(1,TN) transpose.
    logits = lax.dot_general(w4_ref[...], h, (((1,), (1,)), ((), ())),
                             preferred_element_type=jnp.float32)       # (1, TN)
    out_ref[...] = jax.nn.sigmoid(logits + b4_ref[...])[None]          # (1, 1, TN)


def h3_heads(feats_bf, glob_part, h3p, tile_n, n_valid, vmem_limit):
    """feats_bf: (G, N_pad, C) bf16; glob_part: (G, 1, 512) f32 -> mask (G, n_valid)."""
    G, n_pad, C = feats_bf.shape
    Ch = glob_part.shape[-1]
    w1f, s1, t1 = h3p["l1"]
    w2, s2, t2 = h3p["l2"]
    w3, s3, t3 = h3p["l3"]
    w4, b4 = h3p["l4"]
    weights = [w1f.astype(jnp.bfloat16), s1, t1,
               w2.astype(jnp.bfloat16), s2, t2,
               w3.astype(jnp.bfloat16), s3, t3,
               w4, b4]

    in_specs = [pl.BlockSpec((1, tile_n, C), lambda g, n: (g, n, 0)),
                pl.BlockSpec((1, 1, Ch), lambda g, n: (g, 0, 0))]
    in_specs += [pl.BlockSpec(a.shape, lambda g, n: (0, 0)) for a in weights]

    out = pl.pallas_call(
        _h3_kernel,
        out_shape=jax.ShapeDtypeStruct((G, 1, n_pad), jnp.float32),
        grid_spec=pltpu.PrefetchScalarGridSpec(
            num_scalar_prefetch=0,
            grid=(G, n_pad // tile_n),
            in_specs=in_specs,
            out_specs=pl.BlockSpec((1, 1, tile_n), lambda g, n: (g, 0, n))),
        compiler_params=pltpu.CompilerParams(
            dimension_semantics=("parallel", "parallel"),
            vmem_limit_bytes=vmem_limit),
    )(feats_bf, glob_part, *weights)
    return out[:, 0, :n_valid]


# ------------------------------ parameter setup -------------------------------

def _fold_bn(gamma, bn_beta, mean, var, eps=1e-5):
    scale = gamma / jnp.sqrt(var + eps)
    shift = bn_beta - mean * scale
    return scale, shift


def _init_basic_conv1d(key, in_c, out_c):
    kw, kg, kb, km, kv = jax.random.split(key, 5)
    w = jax.random.normal(kw, (out_c, in_c), jnp.float32) * (1.0 / jnp.sqrt(in_c))
    gamma = 1.0 + 0.1 * jax.random.normal(kg, (out_c,), jnp.float32)
    bn_beta = 0.05 * jax.random.normal(kb, (out_c,), jnp.float32)
    mean = 0.01 * jax.random.normal(km, (out_c,), jnp.float32)
    var = 1.0 + 0.1 * jax.random.uniform(kv, (out_c,), jnp.float32)
    scale, shift = _fold_bn(gamma, bn_beta, mean, var)
    # kernel layout: y_row = x_row @ W_t  with  W_t = W.T of shape (in_c, out_c)
    return w.T, scale[None, :], shift[None, :]


def init_params(key, feat_channels=512):
    keys = jax.random.split(key, 8)
    params = {"attn": [], "h3": {}}
    # global_feat_1/2/3 = self_attention_fc(1024,512), (512,256), (256,512)
    for i, (ic, oc) in enumerate([(1024, 512), (512, 256), (256, 512)]):
        w, s, t = _init_basic_conv1d(keys[i], ic, oc)
        params["attn"].append({"w": w, "scale": s, "shift": t})
    # torch init is nn.Parameter(torch.zeros(1)); use nonzero runtime values so the
    # attention path contributes. Passed via SMEM -> no recompile per beta value.
    params["betas"] = jnp.array([0.5, 0.3, 0.7], jnp.float32)
    # h3 = BasicConv1D(1024,512) -> (512,256) -> (256,128) -> Conv1d(128,1,1) -> Sigmoid
    w1, s1, t1 = _init_basic_conv1d(keys[3], 2 * feat_channels, 512)
    params["h3"]["l1"] = (w1[:feat_channels], w1[feat_channels:], s1, t1)   # split weight
    w2, s2, t2 = _init_basic_conv1d(keys[4], 512, 256)
    params["h3"]["l2"] = (w2, s2, t2)
    w3, s3, t3 = _init_basic_conv1d(keys[5], 256, 128)
    params["h3"]["l3"] = (w3, s3, t3)
    kw4, kb4 = jax.random.split(keys[6])
    w4 = jax.random.normal(kw4, (1, 128), jnp.float32) * (1.0 / jnp.sqrt(128.0))
    b4 = 0.1 * jax.random.normal(kb4, (1, 1), jnp.float32)
    params["h3"]["l4"] = (w4, b4)
    return params


# ------------------------------ full forward pass -----------------------------

def pointnet_mask_forward(template_features, source_features, params):
    """
    template_features, source_features: (B, N, C) channels-last per-point features
    (the DGCNN feature_model output transposed from PyTorch (B, C, N)).
    Returns (mask_y, mask_x), each (B, N), matching PointNetMask.forward.
    """
    # TODO(synk): the DGCNN feature_model (kNN graph construction / EdgeConv) has no
    # clean 1:1 Pallas port here; precomputed per-point features are the inputs.
    B, N, C = template_features.shape
    vmem_limit = _vmem_limit_bytes()
    n_pad, tile_h3, tile_pool = _choose_tiles(N, C, vmem_limit)

    # single bf16 feature stack shared by pooling and both h3 heads (one HBM pass
    # to build it, cheap bf16 reads thereafter)
    feats_bf = jnp.concatenate([template_features, source_features],
                               axis=0).astype(jnp.bfloat16)               # (2B, N, C)
    if n_pad != N:
        feats_bf = jnp.pad(feats_bf, ((0, 0), (0, n_pad - N), (0, 0)))

    pooled = pooling(feats_bf, N, tile_pool, vmem_limit)[:, 0, :]          # (2B, 2C)
    # x chain starts from the SOURCE globals, y chain from the TEMPLATE globals
    g_init = jnp.concatenate([pooled[B:], pooled[:B]], axis=0)             # (2B, 2C)

    w1f, w1g, s1, t1 = params["h3"]["l1"]
    glob_part = attention_chain(g_init, params["attn"], params["betas"],
                                w1g.astype(jnp.bfloat16), vmem_limit)      # (2B, 512)

    masks = h3_heads(feats_bf, glob_part[:, None, :],
                     {"l1": (w1f, s1, t1), "l2": params["h3"]["l2"],
                      "l3": params["h3"]["l3"], "l4": params["h3"]["l4"]},
                     tile_h3, N, vmem_limit)                               # (2B, N)
    mask_y, mask_x = masks[:B], masks[B:]
    return mask_y, mask_x


# ------------------------------ pure-JAX reference -----------------------------

def _ref_forward(tmpl, src, params):
    def bmm(x, w):   # mirrors the kernels' bf16-operand / f32-accumulate matmuls
        return jnp.matmul(x.astype(jnp.bfloat16), w.astype(jnp.bfloat16),
                          preferred_element_type=jnp.float32)

    def mish(x):
        return x * jnp.tanh(jax.nn.softplus(x))

    def pool(f):
        f = f.astype(jnp.bfloat16).astype(jnp.float32)   # kernels pool the bf16 stack
        return jnp.concatenate([jnp.max(f, axis=1, keepdims=True),
                                jnp.mean(f, axis=1, keepdims=True)], axis=-1)

    gx, gy = pool(src), pool(tmpl)
    for p, beta in zip(params["attn"], params["betas"]):
        qx = mish(bmm(gx, p["w"]) * p["scale"] + p["shift"])
        qy = mish(bmm(gy, p["w"]) * p["scale"] + p["shift"])
        e = qx[:, 0, :, None] * qy[:, 0, None, :]
        axy = jax.nn.softmax(e, axis=-1)
        ayx = jax.nn.softmax(jnp.swapaxes(e, 1, 2), axis=-1)
        ox = jnp.einsum("bij,bj->bi", axy, qx[:, 0, :])[:, None, :]
        oy = jnp.einsum("bij,bj->bi", ayx, qy[:, 0, :])[:, None, :]
        gx = beta * ox + qx
        gy = beta * oy + qy

    def h3(feat, glob):
        w1f, w1g, s1, t1 = params["h3"]["l1"]
        x = mish((bmm(feat, w1f) + bmm(glob, w1g)) * s1 + t1)
        for name in ("l2", "l3"):
            w, s, t = params["h3"][name]
            x = mish(bmm(x, w) * s + t)
        w4, b4 = params["h3"]["l4"]
        return jax.nn.sigmoid(jnp.sum(x * w4, axis=-1) + b4[0, 0])

    return h3(tmpl, gx), h3(src, gy)


# ------------------------------------ main -------------------------------------

def _run_and_check(kp, kt, ks, B, C, N, tol=2e-3):
    params = init_params(kp, feat_channels=C)
    # PyTorch feature_model output is (B, C, N); transpose to kernel layout (B, N, C).
    tmpl = jnp.transpose(jax.random.normal(kt, (B, C, N), jnp.float32), (0, 2, 1))
    src = jnp.transpose(jax.random.normal(ks, (B, C, N), jnp.float32), (0, 2, 1))

    mask_y, mask_x = pointnet_mask_forward(tmpl, src, params)
    jax.block_until_ready((mask_y, mask_x))

    ref_y, ref_x = _ref_forward(tmpl, src, params)
    assert mask_y.shape == (B, N) and mask_x.shape == (B, N)
    assert jnp.allclose(mask_y, ref_y, atol=tol, rtol=tol), \
        float(jnp.max(jnp.abs(mask_y - ref_y)))
    assert jnp.allclose(mask_x, ref_x, atol=tol, rtol=tol), \
        float(jnp.max(jnp.abs(mask_x - ref_x)))


if __name__ == "__main__":
    key = jax.random.PRNGKey(0)
    kp, kt, ks = jax.random.split(key, 3)

    # DGCNN emb dim must be 512 (max|mean pool-cat -> 1024 attention input).
    # 1) small smoke test: whole-N blocks, no tiling / padding.
    _run_and_check(kp, kt, ks, B=2, C=512, N=16)
    # 2) moderate N exercising point-axis tiling, the lane-dense mask store and the
    #    pad-to-128 + masked-pooling path (N=1200 -> N_pad=1280, h3 tile=640).
    _run_and_check(kp, kt, ks, B=2, C=512, N=1200)

    print("KERNEL_OK")
</pallas_src>

<mosaic_0001>
module attributes {stable_mosaic.version = 11 : i64} {
  func.func @_pooling_kernel(%arg0: i32, %arg1: i32, %arg2: memref<1x16x512xbf16, #tpu.memory_space<vmem>>, %arg3: memref<1x1x1024xf32, #tpu.memory_space<vmem>>, %arg4: memref<1x512xf32, #tpu.memory_space<vmem>>, %arg5: memref<1x512xf32, #tpu.memory_space<vmem>>) attributes {dimension_semantics = [#tpu.dimension_semantics<parallel>, #tpu.dimension_semantics<arbitrary>], iteration_bounds = array<i64: 4, 1>, scalar_prefetch = 0 : i64, scratch_operands = 2 : i64, tpu.core_type = #tpu.core_type<tc>, window_params = [{transform_indices = @transform_0, window_bounds = array<i64: 1, 16, 512>}, {transform_indices = @transform_1, window_bounds = array<i64: 1, 1, 1024>}]} {
    %c0_i32 = arith.constant 0 : i32
    %0 = arith.cmpi eq, %arg1, %c0_i32 : i32
    %1 = arith.extui %0 : i1 to i32
    %c0_i32_0 = arith.constant 0 : i32
    %2 = arith.cmpi ne, %1, %c0_i32_0 : i32
    scf.if %2 {
      %cst_14 = arith.constant 0xFF800000 : f32
      %19 = vector.broadcast %cst_14 : f32 to vector<1x512xf32>
      %c0_15 = arith.constant 0 : index
      %c0_16 = arith.constant 0 : index
      %20 = vector.load %arg4[%c0_15, %c0_16] : memref<1x512xf32, #tpu.memory_space<vmem>>, vector<1x512xf32>
      tpu.vector_store %arg4[%c0_15, %c0_16], %19 {strides = array<i32>} : memref<1x512xf32, #tpu.memory_space<vmem>>, vector<1x512xf32>,
      %cst_17 = arith.constant 0.000000e+00 : f32
      %21 = vector.broadcast %cst_17 : f32 to vector<1x512xf32>
      %c0_18 = arith.constant 0 : index
      %c0_19 = arith.constant 0 : index
      %22 = vector.load %arg5[%c0_18, %c0_19] : memref<1x512xf32, #tpu.memory_space<vmem>>, vector<1x512xf32>
      tpu.vector_store %arg5[%c0_18, %c0_19], %21 {strides = array<i32>} : memref<1x512xf32, #tpu.memory_space<vmem>>, vector<1x512xf32>,
    } else {
    }
    %c0 = arith.constant 0 : index
    %c0_1 = arith.constant 0 : index
    %c0_2 = arith.constant 0 : index
    %3 = vector.load %arg2[%c0, %c0_1, %c0_2] : memref<1x16x512xbf16, #tpu.memory_space<vmem>>, vector<1x16x512xbf16>
    %4 = vector.shape_cast %3 : vector<1x16x512xbf16> to vector<16x512xbf16>
    %5 = arith.extf %4 : vector<16x512xbf16> to vector<16x512xf32>
    %c0_3 = arith.constant 0 : index
    %c0_4 = arith.constant 0 : index
    %6 = vector.load %arg4[%c0_3, %c0_4] : memref<1x512xf32, #tpu.memory_space<vmem>>, vector<1x512xf32>
    %cst = arith.constant dense<0xFF800000> : vector<512xf32>
    %7 = vector.multi_reduction <maximumf>, %5, %cst [0] : vector<16x512xf32> to vector<512xf32>
    %8 = vector.shape_cast %7 : vector<512xf32> to vector<1x512xf32>
    %9 = arith.maximumf %6, %8 : vector<1x512xf32>
    %c0_5 = arith.constant 0 : index
    %c0_6 = arith.constant 0 : index
    %10 = vector.load %arg4[%c0_5, %c0_6] : memref<1x512xf32, #tpu.memory_space<vmem>>, vector<1x512xf32>
    tpu.vector_store %arg4[%c0_5, %c0_6], %9 {strides = array<i32>} : memref<1x512xf32, #tpu.memory_space<vmem>>, vector<1x512xf32>,
    %c0_7 = arith.constant 0 : index
    %c0_8 = arith.constant 0 : index
    %11 = vector.load %arg5[%c0_7, %c0_8] : memref<1x512xf32, #tpu.memory_space<vmem>>, vector<1x512xf32>
    %cst_9 = arith.constant dense<0.000000e+00> : vector<512xf32>
    %12 = vector.multi_reduction <add>, %5, %cst_9 [0] : vector<16x512xf32> to vector<512xf32>
    %13 = vector.shape_cast %12 : vector<512xf32> to vector<1x512xf32>
    %14 = arith.addf %11, %13 : vector<1x512xf32>
    %c0_10 = arith.constant 0 : index
    %c0_11 = arith.constant 0 : index
    %15 = vector.load %arg5[%c0_10, %c0_11] : memref<1x512xf32, #tpu.memory_space<vmem>>, vector<1x512xf32>
    tpu.vector_store %arg5[%c0_10, %c0_11], %14 {strides = array<i32>} : memref<1x512xf32, #tpu.memory_space<vmem>>, vector<1x512xf32>,
    %c0_i32_12 = arith.constant 0 : i32
    %16 = arith.cmpi eq, %arg1, %c0_i32_12 : i32
    %17 = arith.extui %16 : i1 to i32
    %c0_i32_13 = arith.constant 0 : i32
    %18 = arith.cmpi ne, %17, %c0_i32_13 : i32
    scf.if %18 {
      %c0_14 = arith.constant 0 : index
      %c0_15 = arith.constant 0 : index
      %19 = vector.load %arg4[%c0_14, %c0_15] : memref<1x512xf32, #tpu.memory_space<vmem>>, vector<1x512xf32>
      %c0_16 = arith.constant 0 : index
      %c0_17 = arith.constant 0 : index
      %20 = vector.load %arg5[%c0_16, %c0_17] : memref<1x512xf32, #tpu.memory_space<vmem>>, vector<1x512xf32>
      %cst_18 = arith.constant 6.250000e-02 : f32
      %21 = vector.broadcast %cst_18 : f32 to vector<1x512xf32>
      %22 = arith.mulf %20, %21 : vector<1x512xf32>
      %23 = tpu.concatenate %19, %22 in 1 : vector<1x512xf32>, vector<1x512xf32> -> vector<1x1024xf32>
      %24 = vector.shape_cast %23 : vector<1x1024xf32> to vector<1x1x1024xf32>
      %c0_19 = arith.constant 0 : index
      %c0_20 = arith.constant 0 : index
      %c0_21 = arith.constant 0 : index
      %25 = vector.load %arg3[%c0_19, %c0_20, %c0_21] : memref<1x1x1024xf32, #tpu.memory_space<vmem>>, vector<1x1x1024xf32>
      tpu.vector_store %arg3[%c0_19, %c0_20, %c0_21], %24 {strides = array<i32>} : memref<1x1x1024xf32, #tpu.memory_space<vmem>>, vector<1x1x1024xf32>,
    } else {
    }
    return
  }
  func.func @transform_0(%arg0: i32, %arg1: i32) -> (i32, i32, i32) {
    %c0_i32 = arith.constant 0 : i32
    %c0_i32_0 = arith.constant 0 : i32
    return %arg0, %arg1, %c0_i32 : i32, i32, i32
  }
  func.func @transform_1(%arg0: i32, %arg1: i32) -> (i32, i32, i32) {
    %c0_i32 = arith.constant 0 : i32
    %c0_i32_0 = arith.constant 0 : i32
    %c0_i32_1 = arith.constant 0 : i32
    return %arg0, %c0_i32, %c0_i32_0 : i32, i32, i32
  }
}

</mosaic_0001>

<llo_original>
// kernel: tpu_custom_call.1
$region0: #{tpu_custom_call.1}
  #allocation0 [shape = 'u32[]', space=smem, size = 0x4, offset = 0x4, fixed_abs, tag = 'smem constant byte address 0x4 - core index']
  #allocation1 [shape = 'u32[72,128]{1,0:T(1,128)}', space=vmem, size = 0x9000, scoped, tag = 'internal scratch']
  #allocation2 [shape = 'f32[1,512]{1,0:T(1,128)}', space=vmem, size = 0x800, scoped, tag = 'scratch operand']
  #allocation3 [shape = 'f32[1,512]{1,0:T(1,128)}', space=vmem, size = 0x800, scoped, tag = 'scratch operand']
  %s0 = inlined_call_operand.hbm [shape: bf16[4,16,512], index: 0, kind: input, shape index: {}]
  %s1 = inlined_call_operand.hbm [shape: f32[4,1,1024], index: 1, kind: output, shape index: {}]
  %s2 = sld [smem:[#allocation0]]
  $region49: #{tpu_custom_call.1} parent=0
    _
  %s4 = ssub.s32 1, %s2
  %s5 = scalar_select 0, %s4, %s2
  $region1: #{tpu_custom_call.1} parent=0
    #allocation4 [shape = 'u8[32768]{0}', space=vmem, size = 0x8000, scoped, tag = 'input window, operand 0']
    #allocation5 [shape = 's32[2]{0}', space=sflag, size = 0x8, scoped, tag = 'scoped memory for tpu_custom_call.1']
    #allocation6 [shape = 's32[2]{0}', space=sflag, size = 0x8, scoped, tag = 'scoped memory for tpu_custom_call.1']
    #allocation7 [shape = 'u8[8192]{0}', space=vmem, size = 0x2000, scoped, tag = 'output window, operand 0']
    %6 = vsyncpa [#allocation5], 0
    %s7 = scalar_lea.sflag [#allocation5], 1
    %8 = vsyncpa %s7, 0
    %9 = vsyncpa [#allocation6], 0
    %s10 = scalar_lea.sflag [#allocation6], 1
    %11 = vsyncpa %s10, 0
    loop: start=0, step=1, limit=6
    $region2: #{tpu_custom_call.1} parent=1 // loop_pre_header
      _
    $region3: #{tpu_custom_call.1} parent=1 // loop_header
      %s13 = sphi 0, %s17
      %p14 = scmp.ge.s32.totalorder %s13, 6
      %s20 = sphi 0, %s32
      %s21 = sphi 0, %s28
      %s22 = sphi 0, %s20
      %s23 = sphi 0, %s21
      %s24 = sphi 0, %s22
      %s25 = sphi 0, %s23
      %s37 = sphi 0, %s39
      %s40 = sphi 0, %s37
      %s41 = sphi 0, %s40
      %s57 = sphi 0, %s41
      %s63 = sphi 0, %s65
      %s66 = sphi 0, %s63
      %s67 = sphi 0, %s66
      %s83 = sphi 0, %s67
    $region4: #{tpu_custom_call.1} parent=1 // loop_header_branch
      %16 = sbr.rel (%p14) target = $region8
    $region5: #{tpu_custom_call.1} parent=1 // loop_body
      %s18 = ssub.s32 %s13, 1
      %s19 = ssub.s32 %s13, 2
      %s26 = sadd.s32 1, %s21
      %p27 = scmp.ge.s32.totalorder %s26, 1
      %s28 = scalar_select %p27, 0, %s26
      %s29 = sadd.s32 1, %s20
      %s30 = scalar_select %p27, %s29, %s20
      %p31 = scmp.ge.s32.totalorder %s30, 4
      %s32 = scalar_select %p31, 0, %s30
      %s33 = ssub.s32 %s20, %s32
      %s34 = ssub.s32 %s21, %s28
      %s35 = sor.u32 %s33, %s34
      %p36 = scmp.eq.s32.totalorder %s35, 0
      %s38 = sadd.s32 %s37, 1
      %s39 = scalar_select %p36, %s37, %s38
      %p42 = pneg %p36
      %p43 = scmp.eq.s32.totalorder %s13, 3
      %p44 = por %p42, %p43
      %p45 = scmp.ne.s32.totalorder %s37, %s40
      %p46 = scmp.eq.s32.totalorder %s13, 0
      %p47 = por %p45, %p46
      %p48 = scmp.ne.s32.totalorder %s37, %s40
      %p49 = scmp.eq.s32.totalorder %s18, 3
      %p50 = por %p48, %p49
      %p51 = scmp.ne.s32.totalorder %s40, %s41
      %p52 = scmp.eq.s32.totalorder %s18, 0
      %p53 = por %p51, %p52
      %p54 = scmp.ne.s32.totalorder %s40, %s41
      %p55 = scmp.eq.s32.totalorder %s19, 3
      %p56 = por %p54, %p55
      %p58 = scmp.ne.s32.totalorder %s41, %s57
      %p59 = scmp.eq.s32.totalorder %s19, 0
      %p60 = por %p58, %p59
      %s61 = ssub.s32 %s20, %s32
      %p62 = scmp.eq.s32.totalorder %s61, 0
      %s64 = sadd.s32 %s63, 1
      %s65 = scalar_select %p62, %s63, %s64
      %p68 = pneg %p62
      %p69 = scmp.eq.s32.totalorder %s13, 3
      %p70 = por %p68, %p69
      %p71 = scmp.ne.s32.totalorder %s63, %s66
      %p72 = scmp.eq.s32.totalorder %s13, 0
      %p73 = por %p71, %p72
      %p74 = scmp.ne.s32.totalorder %s63, %s66
      %p75 = scmp.eq.s32.totalorder %s18, 3
      %p76 = por %p74, %p75
      %p77 = scmp.ne.s32.totalorder %s66, %s67
      %p78 = scmp.eq.s32.totalorder %s18, 0
      %p79 = por %p77, %p78
      %p80 = scmp.ne.s32.totalorder %s66, %s67
      %p81 = scmp.eq.s32.totalorder %s19, 3
      %p82 = por %p80, %p81
      %p84 = scmp.ne.s32.totalorder %s67, %s83
      %p85 = scmp.eq.s32.totalorder %s19, 0
      %p86 = por %p84, %p85
      %p87 = scmp.le.s32.totalorder 1, %s13
      %p88 = scmp.lt.s32.totalorder %s13, 5
      %p89 = pnand %p87, %p88
      %p90 = pneg %p89
      // Predicated region
      $region9: #{tpu_custom_call.1} parent=5 // pred_check
        _
      $region10: #{tpu_custom_call.1} parent=5 // pred_check_branch
        %92 = sbr.rel (%p89) target = $region12
      $region11: #{tpu_custom_call.1} parent=5 // pred_region
        %s93 = ssub.s32 %s13, 1
      $region12: #{tpu_custom_call.1} parent=5 // pred_fallthru
        _
      %p94 = scmp.lt.s32.totalorder %s13, 4
      // Predicated region
      $region13: #{tpu_custom_call.1} parent=5 // pred_check
        %p95 = pneg %p94
      $region14: #{tpu_custom_call.1} parent=5 // pred_check_branch
        %97 = sbr.rel (%p95) target = $region16
      $region15: #{tpu_custom_call.1} parent=5 // pred_region
        // Predicated region
        $region17: #{tpu_custom_call.1} parent=15 // pred_check
          %p98 = pneg %p47
        $region18: #{tpu_custom_call.1} parent=15 // pred_check_branch
          %100 = sbr.rel (%p98) target = $region20
        $region19: #{tpu_custom_call.1} parent=15 // pred_region
          %s101 = sand.u32 %s37, 1
          %s102 = scalar_lea.sflag [#allocation5], %s101
          %s103 = sand.u32 %s37, 1
          %s104 = smul.addr %s103, 32
          %s105 = scalar_lea.vmem [#allocation4], %s104
          %s106 = smul.u32 2, %s21
          %108 = vsyncadd %s102, 0
          %s109 = smul.addr %s106, 4
          %s110 = smul.addr %s20, 8
          %s111 = sadd.s32 %s109, %s110
          %s112 = smul.addr %s111, 4
          %s113 = scalar_lea.hbm %s0, %s112
          %s114 = sshll.u32 %s113, 4
          %s115 = int_to_ptr.hbm [resolvable:$true] %s114
          %s116 = sshll.u32 %s105, 4
          %s117 = int_to_ptr.vmem [resolvable:$true] %s116
          %122 = dma.hbm_to_vmem [thread:$0]  %s115, 512, %s117, %s102, 256, 256, 16
        $region20: #{tpu_custom_call.1} parent=15 // pred_fallthru
          _
      $region16: #{tpu_custom_call.1} parent=5 // pred_fallthru
        _
      %p123 = scmp.le.s32.totalorder 1, %s13
      %p124 = scmp.lt.s32.totalorder %s13, 5
      %p125 = pnand %p123, %p124
      %p126 = pneg %p125
      // Predicated region
      $region21: #{tpu_custom_call.1} parent=5 // pred_check
        _
      $region22: #{tpu_custom_call.1} parent=5 // pred_check_branch
        %128 = sbr.rel (%p125) target = $region24
      $region23: #{tpu_custom_call.1} parent=5 // pred_region
        %s129 = ssub.s32 %s13, 1
        %s130 = sand.u32 %s40, 1
        %s131 = scalar_lea.sflag [#allocation5], %s130
        %s132 = sand.u32 %s40, 1
        %s133 = smul.addr %s132, 32
        %s134 = scalar_lea.vmem [#allocation4], %s133
        // Predicated region
        $region25: #{tpu_custom_call.1} parent=23 // pred_check
          %p135 = pneg %p53
        $region26: #{tpu_custom_call.1} parent=23 // pred_check_branch
          %137 = sbr.rel (%p135) target = $region28
        $region27: #{tpu_custom_call.1} parent=23 // pred_region
          %139 = dma.done %s131, 512
        $region28: #{tpu_custom_call.1} parent=23 // pred_fallthru
          _
        %s140 = sand.u32 %s40, 1
        %s141 = scalar_lea.sflag [#allocation5], %s140
        %s142 = sand.u32 %s40, 1
        %s143 = smul.addr %s142, 32
        %s144 = scalar_lea.vmem [#allocation4], %s143
        %p145 = pneg %p53
        %p146 = pneg %p50
        %p147 = pneg %p79
        %p148 = pneg %p76
        %s149 = sand.u32 %s66, 1
        %s150 = scalar_lea.sflag [#allocation6], %s149
        %s151 = sand.u32 %s66, 1
        %s152 = smul.addr %s151, 8
        %s153 = scalar_lea.vmem [#allocation7], %s152
        %s154 = smul.u32 2, %s23
        %p155 = scmp.eq.s32.totalorder %s23, 0
        // Predicated region
        $region29: #{tpu_custom_call.1} parent=23 // pred_check
          %p156 = pneg %p155
        $region30: #{tpu_custom_call.1} parent=23 // pred_check_branch
          %158 = sbr.rel (%p156) target = $region32
        $region31: #{tpu_custom_call.1} parent=23 // pred_region
          %v159 = vlaneseq
          %vm160 = vcmp.ge.s32.totalorder %v159, 0
          %vm161 = vcmp.lt.s32.totalorder %v159, 512
          %vm162 = vmand %vm160, %vm161
          %163 = vst.msk [vmem:[#allocation2] sm:$0xf] %vm162, -inf
          %164 = vst.msk [vmem:[#allocation3] sm:$0xf] %vm162, 0.0
        $region32: #{tpu_custom_call.1} parent=23 // pred_fallthru
          _
        %v165 = vld [vmem:[%s134] sm:$0xff]
        %v166 = vld [vmem:[%s134 + $0x8] sm:$0xff]
        %v167 = vld [vmem:[%s134 + $0x10] sm:$0xff]
        %v168 = vld [vmem:[%s134 + $0x18] sm:$0xff]
        %v169 = vunpack.c.l.bf16 %v165
        %v170 = vunpack.c.h.bf16 %v165
        %v171 = vunpack.c.l.bf16 %v166
        %v172 = vunpack.c.h.bf16 %v166
        %v173 = vunpack.c.l.bf16 %v167
        %v174 = vunpack.c.h.bf16 %v167
        %v175 = vunpack.c.l.bf16 %v168
        %v176 = vunpack.c.h.bf16 %v168
        %v177 = vld [vmem:[#allocation2] sm:$0xf]
        %v178 = vmax.f32 %v169, %v173
        %v179 = vrot.slane %v178, 4
        %v180 = vmax.f32 %v178, %v179
        %v181 = vrot.slane %v180, 2
        %v182 = vmax.f32 %v180, %v181
        %v183 = vrot.slane %v182, 1
        %v184 = vmax.f32 %v182, %v183
        %v185 = vmax.f32 %v170, %v174
        %v186 = vrot.slane %v185, 4
        %v187 = vmax.f32 %v185, %v186
        %v188 = vrot.slane %v187, 2
        %v189 = vmax.f32 %v187, %v188
        %v190 = vrot.slane %v189, 1
        %v191 = vmax.f32 %v189, %v190
        %v192 = vmax.f32 %v171, %v175
        %v193 = vrot.slane %v192, 4
        %v194 = vmax.f32 %v192, %v193
        %v195 = vrot.slane %v194, 2
        %v196 = vmax.f32 %v194, %v195
        %v197 = vrot.slane %v196, 1
        %v198 = vmax.f32 %v196, %v197
        %v199 = vmax.f32 %v172, %v176
        %v200 = vrot.slane %v199, 4
        %v201 = vmax.f32 %v199, %v200
        %v202 = vrot.slane %v201, 2
        %v203 = vmax.f32 %v201, %v202
        %v204 = vrot.slane %v203, 1
        %v205 = vmax.f32 %v203, %v204
        %v210 = vrot.slane %v191, 7
        %v211 = vrot.slane %v198, 6
        %v212 = vrot.slane %v205, 5
        %vm213 = vcmask 1040384
        %v214 = vsel %vm213, %v184, %v210
        %vm215 = vcmask 1042434
        %v216 = vsel %vm215, %v211, %v212
        %vm217 = vcmask 1041408
        %v218 = vsel %vm217, %v214, %v216
        %v220 = vmax.f32 %v177, %v218
        %v221 = vlaneseq
        %vm222 = vcmp.ge.s32.totalorder %v221, 0
        %vm223 = vcmp.lt.s32.totalorder %v221, 512
        %vm224 = vmand %vm222, %vm223
        %225 = vst.msk [vmem:[#allocation2] sm:$0xf] %vm224, %v220
        %v226 = vld [vmem:[#allocation3] sm:$0xf]
        %v227 = vadd.f32 %v169, %v173
        %v228 = vrot.slane %v227, 4
        %v229 = vadd.f32 %v227, %v228
        %v230 = vrot.slane %v229, 2
        %v231 = vadd.f32 %v229, %v230
        %v232 = vrot.slane %v231, 1
        %v233 = vadd.f32 %v231, %v232
        %v234 = vadd.f32 %v170, %v174
        %v235 = vrot.slane %v234, 4
        %v236 = vadd.f32 %v234, %v235
        %v237 = vrot.slane %v236, 2
        %v238 = vadd.f32 %v236, %v237
        %v239 = vrot.slane %v238, 1
        %v240 = vadd.f32 %v238, %v239
        %v241 = vadd.f32 %v171, %v175
        %v242 = vrot.slane %v241, 4
        %v243 = vadd.f32 %v241, %v242
        %v244 = vrot.slane %v243, 2
        %v245 = vadd.f32 %v243, %v244
        %v246 = vrot.slane %v245, 1
        %v247 = vadd.f32 %v245, %v246
        %v248 = vadd.f32 %v172, %v176
        %v249 = vrot.slane %v248, 4
        %v250 = vadd.f32 %v248, %v249
        %v251 = vrot.slane %v250, 2
        %v252 = vadd.f32 %v250, %v251
        %v253 = vrot.slane %v252, 1
        %v254 = vadd.f32 %v252, %v253
        %v259 = vrot.slane %v240, 7
        %v260 = vrot.slane %v247, 6
        %v261 = vrot.slane %v254, 5
        %v262 = vsel %vm213, %v233, %v259
        %v263 = vsel %vm215, %v260, %v261
        %v264 = vsel %vm217, %v262, %v263
        %v266 = vadd.f32 %v226, %v264
        %267 = vst.msk [vmem:[#allocation3] sm:$0xf] %vm224, %v266
        // Predicated region
        $region33: #{tpu_custom_call.1} parent=23 // pred_check
          %p268 = pneg %p155
        $region34: #{tpu_custom_call.1} parent=23 // pred_check_branch
          %270 = sbr.rel (%p268) target = $region36
        $region35: #{tpu_custom_call.1} parent=23 // pred_region
          %v271 = vld [vmem:[#allocation2] sm:$0xf]
          %v272 = vld [vmem:[#allocation3] sm:$0xf]
          %v273 = vmul.f32 %v272, 0.0625
          %v275 = vperm.slane %v271, 0
          %v276 = vperm.slane %v271, 1
          %v277 = vperm.slane %v271, 2
          %v278 = vperm.slane %v271, 3
          %v280 = vperm.slane %v273, 0
          %v281 = vperm.slane %v273, 1
          %v282 = vperm.slane %v273, 2
          %v283 = vperm.slane %v273, 3
          %v284 = vrot.slane %v276, 7
          %v285 = vrot.slane %v277, 6
          %v286 = vrot.slane %v278, 5
          %v287 = vrot.slane %v280, 4
          %v288 = vrot.slane %v281, 3
          %v289 = vrot.slane %v282, 2
          %v290 = vrot.slane %v283, 1
          %v291 = vsel %vm213, %v275, %v284
          %v292 = vsel %vm215, %v285, %v286
          %v293 = vsel %vm217, %v291, %v292
          %vm294 = vcmask 1044484
          %v295 = vsel %vm294, %v287, %v288
          %vm296 = vcmask 1046534
          %v297 = vsel %vm296, %v289, %v290
          %vm298 = vcmask 1045508
          %v299 = vsel %vm298, %v295, %v297
          %vm300 = vcmask 1043456
          %v301 = vsel %vm300, %v293, %v299
          %303 = vst [vmem:[%s153] sm:$0xff] %v301
        $region36: #{tpu_custom_call.1} parent=23 // pred_fallthru
          _
        %s304 = sand.u32 %s66, 1
        %s305 = scalar_lea.sflag [#allocation6], %s304
        %s306 = sand.u32 %s66, 1
        %s307 = smul.addr %s306, 8
        %s308 = scalar_lea.vmem [#allocation7], %s307
        // Predicated region
        $region37: #{tpu_custom_call.1} parent=23 // pred_check
          %p309 = pneg %p76
        $region38: #{tpu_custom_call.1} parent=23 // pred_check_branch
          %311 = sbr.rel (%p309) target = $region40
        $region39: #{tpu_custom_call.1} parent=23 // pred_region
          %313 = vsyncadd %s305, 0
          %s314 = smul.addr %s22, 8
          %s315 = scalar_lea.hbm %s1, %s314
          %s317 = sshll.u32 %s308, 4
          %s318 = int_to_ptr.vmem [resolvable:$true] %s317
          %s319 = sshll.u32 %s315, 4
          %s320 = int_to_ptr.hbm [resolvable:$true] %s319
          %322 = dma.vmem_to_hbm [thread:$0]  %s318, 128, %s320, %s305
        $region40: #{tpu_custom_call.1} parent=23 // pred_fallthru
          _
      $region24: #{tpu_custom_call.1} parent=5 // pred_fallthru
        _
      %p323 = scmp.le.s32.totalorder 2, %s13
      // Predicated region
      $region41: #{tpu_custom_call.1} parent=5 // pred_check
        %p324 = pneg %p323
      $region42: #{tpu_custom_call.1} parent=5 // pred_check_branch
        %326 = sbr.rel (%p324) target = $region44
      $region43: #{tpu_custom_call.1} parent=5 // pred_region
        %s327 = ssub.s32 %s13, 2
        // Predicated region
        $region45: #{tpu_custom_call.1} parent=43 // pred_check
          %p328 = pneg %p82
        $region46: #{tpu_custom_call.1} parent=43 // pred_check_branch
          %330 = sbr.rel (%p328) target = $region48
        $region47: #{tpu_custom_call.1} parent=43 // pred_region
          %s331 = sand.u32 %s67, 1
          %s332 = scalar_lea.sflag [#allocation6], %s331
          %s333 = sand.u32 %s67, 1
          %s334 = smul.addr %s333, 8
          %s335 = scalar_lea.vmem [#allocation7], %s334
          %337 = dma.done %s332, 128
        $region48: #{tpu_custom_call.1} parent=43 // pred_fallthru
          _
      $region44: #{tpu_custom_call.1} parent=5 // pred_fallthru
        _
    $region6: #{tpu_custom_call.1} parent=1 // loop_footer
      %s17 = sadd.s32 1, %s13
    $region7: #{tpu_custom_call.1} parent=1 // loop_footer_branch
      %12 = sbr.rel target = $region3
    $region8: #{tpu_custom_call.1} parent=1 // loop_exit
      _
    %338 = vsyncpa [#allocation5], 1
    %s339 = scalar_lea.sflag [#allocation5], 1
    %340 = vsyncpa %s339, 1
    %341 = vsyncpa [#allocation6], 1
    %s342 = scalar_lea.sflag [#allocation6], 1
    %343 = vsyncpa %s342, 1

</llo_original>
